<compile_context>
chip_gen: v7x
topology: tpu7x:2x2x1
jax: 0.10.0
libtpu: 0.0.40
codegen_flags: <defaults>
</compile_context>

<pallas_src>
import functools

import jax
import jax.numpy as jnp
from jax.experimental import pallas as pl
from jax.experimental.pallas import tpu as pltpu

_LANE = 128
_SUBLANE = 8


def _cdiv(a, b):
    return -(-a // b)


def _round_up(x, m):
    return _cdiv(x, m) * m


def _single_step_kernel(x_ref, w_ref, o_ref, *, d):
    """D fits in one block (d <= tk_max): no accumulator, no pl.when."""
    w = w_ref[...].astype(jnp.float32)                      # (1, d)
    n_full = d // _LANE
    rem = d - n_full * _LANE

    acc = None
    for c in range(n_full):
        lo = c * _LANE
        prod = (x_ref[:, lo:lo + _LANE].astype(jnp.float32)
                * w[:, lo:lo + _LANE])                      # (tb, 128)
        acc = prod if acc is None else acc + prod
    if acc is not None:
        row = jnp.sum(acc, axis=-1)                         # (tb,)
    else:
        row = jnp.zeros((x_ref.shape[0],), jnp.float32)
    if rem:
        lo = n_full * _LANE
        tail = (x_ref[:, lo:d].astype(jnp.float32) * w[:, lo:d])  # (tb, rem)
        row = row + jnp.sum(tail, axis=-1)
    # Lane-dense output row; padded batch lanes are dropped in the wrapper.
    o_ref[...] = row[None, :].astype(o_ref.dtype)


def _multi_step_kernel(x_ref, w_ref, o_ref, acc_ref, *, d, tk, num_k, w_resident):
    """Grid = (batch_tiles, k_steps); reduction over the last ('arbitrary') axis."""
    k = pl.program_id(1)

    @pl.when(k == 0)
    def _init():
        acc_ref[...] = jnp.zeros_like(acc_ref)

    if w_resident:
        # Full weight, reshaped to (num_k, tk), resident in VMEM: pick row k.
        w_win = w_ref[pl.ds(k, 1), :].astype(jnp.float32)    # (1, tk)
    else:
        w_win = w_ref[...].astype(jnp.float32)               # (1, tk) block for this k

    lane_ids = jax.lax.broadcasted_iota(jnp.int32, (1, _LANE), 1)
    col0 = k * tk                                            # dynamic column base

    def chunk_prod(c):
        lo = c * _LANE
        # (1,128) weight chunk broadcast against (tb,128) feature chunk on the VPU.
        prod = (x_ref[:, lo:lo + _LANE].astype(jnp.float32)
                * w_win[:, lo:lo + _LANE])
        # Static gate: only chunks that can run past the true feature count D
        # (which happens only at the last K step) pay for the dynamic mask.
        if (num_k - 1) * tk + lo + _LANE > d:
            prod = jnp.where(col0 + lo + lane_ids < d, prod, 0.0)
        return prod

    partial = chunk_prod(0)
    for c in range(1, tk // _LANE):
        partial = partial + chunk_prod(c)
    acc_ref[...] += partial

    @pl.when(k == num_k - 1)
    def _finalize():
        # Single cross-lane (XLU) reduce per batch tile, stored lane-dense.
        row = jnp.sum(acc_ref[...], axis=-1)                 # (tb,)
        o_ref[...] = row[None, :].astype(o_ref.dtype)        # (1, tb)


def leastsquare_linear_forward(features, weight, *, tb_max=1024, tk_max=2048,
                               resident_w_bytes=4 << 20,
                               vmem_limit_bytes=40 << 20):
    """features: (B, ...); weight: (1, D) with D = prod(features.shape[1:])."""
    B = features.shape[0]
    x = features.reshape(B, -1)            # same as torch .view(B, -1)
    D = x.shape[1]
    assert weight.shape == (1, D)
    out_dtype = features.dtype

    # ---- batch tiling: never pad x; aim for >= 2 tiles (v7x dual-TC) -------
    if B <= _LANE:
        tb = B                              # block == full batch dim (always legal)
    else:
        tb = min(tb_max, max(_LANE, _round_up(_cdiv(B, 2), _LANE)))  # mult of 128, <= B
    n_b = _cdiv(B, tb)
    b_pad = n_b * tb                        # only the tiny OUTPUT is padded

    if D <= tk_max:
        # -------- single K step: block covers the full feature dim exactly --
        kernel = functools.partial(_single_step_kernel, d=D)
        grid = (n_b,)
        in_specs = [
            pl.BlockSpec((tb, D), lambda i: (i, 0)),          # features tile
            pl.BlockSpec((1, D), lambda i: (0, 0)),           # whole weight, resident
        ]
        out_specs = pl.BlockSpec((1, tb), lambda i: (0, i))
        scratch_shapes = []
        dims = ("parallel",)
        w_arg = weight
    else:
        # -------- multi K step: D reduced along the last grid axis ----------
        tk = tk_max                                           # multiple of 128, <= D
        num_k = _cdiv(D, tk)
        w_pad = num_k * tk
        w_resident = w_pad * weight.dtype.itemsize <= resident_w_bytes
        kernel = functools.partial(_multi_step_kernel, d=D, tk=tk, num_k=num_k,
                                   w_resident=w_resident)
        grid = (n_b, num_k)
        if w_resident:
            # Pad (tiny) + reshape so the kernel picks its K-window with a
            # leading-axis slice; DMA'd into VMEM once for the whole grid.
            w_arg = weight if w_pad == D else jnp.pad(weight, ((0, 0), (0, w_pad - D)))
            w_arg = w_arg.reshape(num_k, tk)
            w_spec = pl.BlockSpec((num_k, tk), lambda i, k: (0, 0))
        else:
            # Huge D fallback: stream (1, tk) weight blocks; ragged tail block
            # is safe because the kernel masks those product lanes anyway.
            w_arg = weight
            w_spec = pl.BlockSpec((1, tk), lambda i, k: (0, k))
        in_specs = [
            pl.BlockSpec((tb, tk), lambda i, k: (i, k)),      # features tile
            w_spec,
        ]
        out_specs = pl.BlockSpec((1, tb), lambda i, k: (0, i))
        scratch_shapes = [pltpu.VMEM((tb, _LANE), jnp.float32)]
        dims = ("parallel", "arbitrary")

    out = pl.pallas_call(
        kernel,
        out_shape=jax.ShapeDtypeStruct((1, b_pad), out_dtype),
        grid_spec=pltpu.PrefetchScalarGridSpec(
            num_scalar_prefetch=0,
            grid=grid,
            in_specs=in_specs,
            out_specs=out_specs,
            scratch_shapes=scratch_shapes),
        compiler_params=pltpu.CompilerParams(
            dimension_semantics=dims,
            vmem_limit_bytes=vmem_limit_bytes),
    )(x, w_arg)

    # (1, b_pad) lane-dense slab -> (B, 1), matching torch Linear output layout.
    return out[0, :B].reshape(B, 1)


if __name__ == "__main__":
    hi = jax.lax.Precision.HIGHEST

    # --- small demo shape consistent with the module: batch=8, features (4,8)
    key = jax.random.PRNGKey(0)
    k_x, k_w = jax.random.split(key)
    B, F0, F1 = 8, 4, 8
    D = F0 * F1
    features = jax.random.normal(k_x, (B, F0, F1), dtype=jnp.float32)
    bound = 1.0 / (D ** 0.5)   # torch.nn.Linear default init range
    weight = jax.random.uniform(k_w, (1, D), dtype=jnp.float32,
                                minval=-bound, maxval=bound)

    out = jax.block_until_ready(leastsquare_linear_forward(features, weight))
    ref = jnp.matmul(features.reshape(B, -1), weight.T, precision=hi)
    assert out.shape == (B, 1)
    assert jnp.allclose(out, ref, atol=1e-5, rtol=1e-5)

    # --- single-K-step path: ragged D (tail chunk), 2 batch tiles, ragged batch
    k1, k2 = jax.random.split(jax.random.PRNGKey(1))
    B1, D1 = 300, 1300
    x1 = jax.random.normal(k1, (B1, D1), dtype=jnp.float32)
    w1 = jax.random.uniform(k2, (1, D1), dtype=jnp.float32,
                            minval=-1.0 / D1 ** 0.5, maxval=1.0 / D1 ** 0.5)
    o1 = jax.block_until_ready(leastsquare_linear_forward(x1, w1))
    r1 = jnp.matmul(x1, w1.T, precision=hi)
    assert o1.shape == (B1, 1)
    assert jnp.allclose(o1, r1, atol=1e-3, rtol=1e-3)

    # --- multi-K-step path: resident weight, masked ragged-D tail, ragged batch
    k3, k4 = jax.random.split(jax.random.PRNGKey(2))
    B2, D2 = 1030, 2600
    x2 = jax.random.normal(k3, (B2, D2), dtype=jnp.float32)
    w2 = jax.random.uniform(k4, (1, D2), dtype=jnp.float32,
                            minval=-1.0 / D2 ** 0.5, maxval=1.0 / D2 ** 0.5)
    o2 = jax.block_until_ready(leastsquare_linear_forward(x2, w2))
    r2 = jnp.matmul(x2, w2.T, precision=hi)
    assert o2.shape == (B2, 1)
    assert jnp.allclose(o2, r2, atol=1e-3, rtol=1e-3)

    # --- same shape, forcing the streamed (non-resident) weight path
    o3 = jax.block_until_ready(
        leastsquare_linear_forward(x2, w2, resident_w_bytes=0))
    assert jnp.allclose(o3, r2, atol=1e-3, rtol=1e-3)

    print("KERNEL_OK")
</pallas_src>

<mosaic_0001>
module attributes {stable_mosaic.version = 11 : i64} {
  func.func @_single_step_kernel(%arg0: i32, %arg1: memref<8x32xf32, #tpu.memory_space<vmem>>, %arg2: memref<1x32xf32, #tpu.memory_space<vmem>>, %arg3: memref<1x8xf32, #tpu.memory_space<vmem>>) attributes {dimension_semantics = [#tpu.dimension_semantics<parallel>], iteration_bounds = array<i64: 1>, scalar_prefetch = 0 : i64, scratch_operands = 0 : i64, tpu.core_type = #tpu.core_type<tc>, window_params = [{transform_indices = @transform_0, window_bounds = array<i64: 8, 32>}, {pipeline_mode = #tpu.pipeline_mode<synchronous>, transform_indices = @transform_1, window_bounds = array<i64: 1, 32>}, {transform_indices = @transform_2, window_bounds = array<i64: 1, 8>}]} {
    %c0 = arith.constant 0 : index
    %c0_0 = arith.constant 0 : index
    %0 = vector.load %arg2[%c0, %c0_0] : memref<1x32xf32, #tpu.memory_space<vmem>>, vector<1x32xf32>
    %cst = arith.constant 0.000000e+00 : f32
    %1 = vector.broadcast %cst : f32 to vector<8xf32>
    %c0_1 = arith.constant 0 : index
    %c0_2 = arith.constant 0 : index
    %2 = vector.load %arg1[%c0_1, %c0_2] : memref<8x32xf32, #tpu.memory_space<vmem>>, vector<8x32xf32>
    %3 = vector.broadcast %0 : vector<1x32xf32> to vector<8x32xf32>
    %4 = arith.mulf %2, %3 : vector<8x32xf32>
    %cst_3 = arith.constant dense<0.000000e+00> : vector<8xf32>
    %5 = vector.multi_reduction <add>, %4, %cst_3 [1] : vector<8x32xf32> to vector<8xf32>
    %6 = arith.addf %1, %5 : vector<8xf32>
    %7 = vector.shape_cast %6 : vector<8xf32> to vector<1x8xf32>
    %c0_4 = arith.constant 0 : index
    %c0_5 = arith.constant 0 : index
    %8 = vector.load %arg3[%c0_4, %c0_5] : memref<1x8xf32, #tpu.memory_space<vmem>>, vector<1x8xf32>
    tpu.vector_store %arg3[%c0_4, %c0_5], %7 {strides = array<i32>} : memref<1x8xf32, #tpu.memory_space<vmem>>, vector<1x8xf32>,
    return
  }
  func.func @transform_0(%arg0: i32) -> (i32, i32) {
    %c0_i32 = arith.constant 0 : i32
    %c0_i32_0 = arith.constant 0 : i32
    return %arg0, %c0_i32 : i32, i32
  }
  func.func @transform_1(%arg0: i32) -> (i32, i32) {
    %c0_i32 = arith.constant 0 : i32
    %c0_i32_0 = arith.constant 0 : i32
    %c0_i32_1 = arith.constant 0 : i32
    return %c0_i32, %c0_i32_0 : i32, i32
  }
  func.func @transform_2(%arg0: i32) -> (i32, i32) {
    %c0_i32 = arith.constant 0 : i32
    %c0_i32_0 = arith.constant 0 : i32
    return %c0_i32, %arg0 : i32, i32
  }
}

</mosaic_0001>

<llo_original>
// kernel: tpu_custom_call.1
$region0: #{tpu_custom_call.1}
  #allocation0 [shape = 'u32[]', space=smem, size = 0x4, offset = 0x4, fixed_abs, tag = 'smem constant byte address 0x4 - core index']
  #allocation1 [shape = 'u32[144,128]{1,0:T(1,128)}', space=vmem, size = 0x12000, scoped, tag = 'internal scratch']
  %s0 = inlined_call_operand.hbm [shape: f32[8,32], index: 0, kind: input, shape index: {}]
  %s1 = inlined_call_operand.vmem [shape: f32[1,32], index: 1, kind: input, shape index: {}]
  %s2 = inlined_call_operand.hbm [shape: f32[1,8], index: 2, kind: output, shape index: {}]
  %s3 = sld [smem:[#allocation0]]
  $region22: #{tpu_custom_call.1} parent=0
    _
  %s5 = ssub.s32 1, %s3
  %s6 = scalar_select 0, %s5, %s3
  $region1: #{tpu_custom_call.1} parent=0
    #allocation2 [shape = 'u8[4096]{0}', space=vmem, size = 0x1000, scoped, tag = 'input window, operand 0, single buffered']
    #allocation3 [shape = 's32[1]{0}', space=sflag, size = 0x4, scoped, tag = 'scoped memory for tpu_custom_call.1']
    #allocation4 [shape = 's32[1]{0}', space=sflag, size = 0x4, scoped, tag = 'scoped memory for tpu_custom_call.1']
    #allocation5 [shape = 'u8[512]{0}', space=vmem, size = 0x400, scoped, tag = 'output window, operand 0, single buffered']
    %7 = vsyncpa [#allocation3], 0
    %8 = vsyncpa [#allocation4], 0
    // Predicated region
    $region2: #{tpu_custom_call.1} parent=1 // pred_check
      _
    $region3: #{tpu_custom_call.1} parent=1 // pred_check_branch
      %10 = sbr.rel (0) target = $region5
    $region4: #{tpu_custom_call.1} parent=1 // pred_region
      %s12 = ssub.s32 128, 128
      %13 = vsyncadd [#allocation3], %s12
      %s15 = sshll.u32 [#allocation2], 4
      %s16 = int_to_ptr.vmem [resolvable:$true] %s15
      %18 = dma.hbm_to_vmem [thread:$0]  %s0, 128, %s16, [#allocation3]
    $region5: #{tpu_custom_call.1} parent=1 // pred_fallthru
      _
    // Predicated region
    $region6: #{tpu_custom_call.1} parent=1 // pred_check
      _
    $region7: #{tpu_custom_call.1} parent=1 // pred_check_branch
      %20 = sbr.rel (0) target = $region9
    $region8: #{tpu_custom_call.1} parent=1 // pred_region
      _
    $region9: #{tpu_custom_call.1} parent=1 // pred_fallthru
      _
    // Predicated region
    $region10: #{tpu_custom_call.1} parent=1 // pred_check
      _
    $region11: #{tpu_custom_call.1} parent=1 // pred_check_branch
      %22 = sbr.rel (0) target = $region13
    $region12: #{tpu_custom_call.1} parent=1 // pred_region
      %23 = dma.done [#allocation3], 128
    $region13: #{tpu_custom_call.1} parent=1 // pred_fallthru
      _
    %v24 = vld [vmem:[%s1] sm:$0x1]
    %v25 = vld [vmem:[#allocation2] sm:$0xff]
    %v27 = vlaneseq
    %v28 = vshrl.u32 %v27, 7
    %v29 = vsub.s32 0, %v28
    %v30 = vrot.slane %v24, %v29
    %v32 = vmul.f32 %v25, %v30
    %vm33 = vcmask 261120
    %v34 = vsel %vm33, %v32, 0.0
    %35 = vadd.xlane.f32.xlu0 %v34
    %v36 = vpop.xlane.xlu0 %35
    %v37 = vadd.f32 %v36, 0.0
    %v39 = vlaneseq
    %v40 = vand.u32 %v39, 127
    %v41 = vlaneseq
    %v42 = vshrl.u32 %v41, 7
    %v43 = vsub.s32 %v40, %v42
    %v44 = vrot.slane %v37, %v43
    %vm46 = vcmask 57344
    %47 = vst.msk [vmem:[#allocation5] sm:$0x1] %vm46, %v44
    // Predicated region
    $region14: #{tpu_custom_call.1} parent=1 // pred_check
      _
    $region15: #{tpu_custom_call.1} parent=1 // pred_check_branch
      %49 = sbr.rel (0) target = $region17
    $region16: #{tpu_custom_call.1} parent=1 // pred_region
      %s51 = ssub.s32 16, 16
      %52 = vsyncadd [#allocation4], %s51
      %s54 = sshll.u32 [#allocation5], 4
      %s55 = int_to_ptr.vmem [resolvable:$true] %s54
      %57 = dma.vmem_to_hbm [thread:$0]  %s55, 16, %s2, [#allocation4]
    $region17: #{tpu_custom_call.1} parent=1 // pred_fallthru
      _
    // Predicated region
    $region18: #{tpu_custom_call.1} parent=1 // pred_check
      _
    $region19: #{tpu_custom_call.1} parent=1 // pred_check_branch
      %59 = sbr.rel (0) target = $region21
    $region20: #{tpu_custom_call.1} parent=1 // pred_region
      %60 = dma.done [#allocation4], 16
    $region21: #{tpu_custom_call.1} parent=1 // pred_fallthru
      _
    %61 = vsyncpa [#allocation3], 1
    %62 = vsyncpa [#allocation4], 1

</llo_original>
